<compile_context>
chip_gen: v5e
topology: v5e:2x2
jax: 0.10.0
libtpu: 0.0.40
codegen_flags: <defaults>
</compile_context>

<pallas_src>
import jax
import jax.numpy as jnp
from jax.experimental import pallas as pl
from jax.experimental.pallas import tpu as pltpu


def _round_up(v, m):
    return ((v + m - 1) // m) * m


# ---------------------------------------------------------------------------
# Kernel
# ---------------------------------------------------------------------------
def _classifier_kernel(x_ref, w_ref, b_ref, o_ref):
    # x_ref: (tm, tk) bf16, w_ref: (tk, tn) bf16, b_ref: (1, tn) f32,
    # o_ref: (tm, tn) f32  (VMEM-resident across the k axis -> acts as the
    # accumulator; no scratch needed).
    k = pl.program_id(2)

    @pl.when(k == 0)
    def _():
        # Fold the bias into the accumulator init (replaces the zero-init +
        # epilogue bias-add of the previous version).
        o_ref[...] = jnp.broadcast_to(b_ref[...], o_ref.shape)

    # Pure MXU inner step: bf16 x bf16 -> f32 accumulate.
    o_ref[...] += jnp.dot(x_ref[...], w_ref[...],
                          preferred_element_type=jnp.float32)

    # Epilogue on the last K step: tanh (EUP) in place.
    @pl.when(k == pl.num_programs(2) - 1)
    def _():
        o_ref[...] = jnp.tanh(o_ref[...])


# ---------------------------------------------------------------------------
# Parameter preparation (done ONCE at load time, not per forward call)
# ---------------------------------------------------------------------------
def prepare_classifier_params(weight, bias, *, tn=None, tk=None):
    """Transpose, pad and cast nn.Linear params once.

    weight: (out_features, in_features) float32 (torch nn.Linear layout)
    bias:   (out_features,)             float32
    """
    N, K = weight.shape
    tn = tn or min(512, _round_up(N, 128))
    tk = tk or min(1024, _round_up(K, 128))
    K_p = _round_up(K, tk)
    N_p = _round_up(N, tn)

    w_t = weight.T  # (K, N) so the kernel does x @ W directly (no XLU transpose)
    w_p = jnp.pad(w_t, ((0, K_p - K), (0, N_p - N))).astype(jnp.bfloat16)
    b_p = jnp.pad(bias, (0, N_p - N)).astype(jnp.float32).reshape(1, N_p)

    return {"w_p": w_p, "b_p": b_p, "K": K, "N": N, "tn": tn, "tk": tk}


# ---------------------------------------------------------------------------
# Forward
# ---------------------------------------------------------------------------
def classifier_forward(x, params, *, tm=None):
    """y = tanh(x @ W^T + b) with pre-prepared params (see prepare_classifier_params)."""
    w_p, b_p = params["w_p"], params["b_p"]
    K, N, tn, tk = params["K"], params["N"], params["tn"], params["tk"]
    K_p, N_p = w_p.shape

    B = x.shape[0]
    # bf16 x tile: second-to-last dim must be a multiple of 16.
    tm = tm or min(512, _round_up(B, 16))
    # Keep the parallel-grid product >= 2 when shapes permit (v7x: 2 TCs
    # are sharded over the "parallel" axes; a 1x1 parallel grid idles one).
    if (N_p // tn) < 2 and (_round_up(B, tm) // tm) < 2 and B >= 32:
        tm = _round_up(pl.cdiv(B, 2), 16)
    B_p = _round_up(B, tm)

    # Pad activations only when needed (K already padded to K_p in params).
    x_in = x
    if (B_p != B) or (K_p != K):
        x_in = jnp.pad(x, ((0, B_p - B), (0, K_p - K)))
    x_bf = x_in.astype(jnp.bfloat16)

    grid = (B_p // tm, N_p // tn, K_p // tk)

    # Double-buffered VMEM footprint (bf16 inputs, f32 output) + margin.
    tile_bytes = 2 * (tm * tk * 2 + tk * tn * 2 + tn * 4 + tm * tn * 4)
    vmem_limit = min(_round_up(tile_bytes, 1 << 20) + (8 << 20), 48 << 20)

    cost = pl.CostEstimate(
        flops=2 * B_p * K_p * N_p,
        transcendentals=B_p * N_p,
        bytes_accessed=B_p * K_p * 2 + K_p * N_p * 2 + N_p * 4 + B_p * N_p * 4,
    )

    out_p = pl.pallas_call(
        _classifier_kernel,
        out_shape=jax.ShapeDtypeStruct((B_p, N_p), jnp.float32),
        grid_spec=pltpu.PrefetchScalarGridSpec(
            num_scalar_prefetch=0,
            grid=grid,
            in_specs=[
                pl.BlockSpec((tm, tk), lambda i, j, k: (i, k)),   # x tile (bf16)
                pl.BlockSpec((tk, tn), lambda i, j, k: (k, j)),   # W^T tile (bf16)
                pl.BlockSpec((1, tn), lambda i, j, k: (0, j)),    # bias tile (f32)
            ],
            out_specs=pl.BlockSpec((tm, tn), lambda i, j, k: (i, j)),
        ),
        compiler_params=pltpu.CompilerParams(
            dimension_semantics=("parallel", "parallel", "arbitrary"),
            vmem_limit_bytes=vmem_limit,
        ),
        cost_estimate=cost,
    )(x_bf, w_p, b_p)

    return out_p[:B, :N]


def classifier_forward_raw(x, weight, bias):
    """Convenience one-shot path (prepares params per call)."""
    return classifier_forward(x, prepare_classifier_params(weight, bias))


# ---------------------------------------------------------------------------
# Demo / self-test
# ---------------------------------------------------------------------------
if __name__ == "__main__":
    key = jax.random.PRNGKey(0)

    def make_inputs(k, B, in_features, out_features):
        kx, kw, kb = jax.random.split(k, 3)
        bound = 1.0 / (in_features ** 0.5)  # PyTorch nn.Linear default init
        x = jax.random.normal(kx, (B, in_features), dtype=jnp.float32)
        w = jax.random.uniform(kw, (out_features, in_features),
                               minval=-bound, maxval=bound, dtype=jnp.float32)
        b = jax.random.uniform(kb, (out_features,),
                               minval=-bound, maxval=bound, dtype=jnp.float32)
        return x, w, b

    # 1) Small, module-consistent shapes (batch=8, in=32, out=16).
    k1, k2 = jax.random.split(key)
    x, w, b = make_inputs(k1, 8, 32, 16)
    params = prepare_classifier_params(w, b)          # done once, reused below
    out = jax.block_until_ready(classifier_forward(x, params))
    ref = jnp.tanh(x @ w.T + b)
    assert out.shape == (8, 16)
    # bf16 inputs -> loosened tolerance.
    assert jnp.allclose(out, ref, atol=2e-2, rtol=2e-2), "small-shape mismatch"

    # 2) Larger shape that exercises multi-tile grid, K accumulation and N padding.
    x2, w2, b2 = make_inputs(k2, 512, 2048, 640)
    params2 = prepare_classifier_params(w2, b2)
    out2 = jax.block_until_ready(classifier_forward(x2, params2))
    ref2 = jnp.tanh(x2 @ w2.T + b2)
    assert out2.shape == (512, 640)
    assert jnp.allclose(out2, ref2, atol=3e-2, rtol=3e-2), "tiled-shape mismatch"

    print("KERNEL_OK")
</pallas_src>

<mosaic_0001>
module attributes {stable_mosaic.version = 11 : i64} {
  func.func @_classifier_kernel(%arg0: i32, %arg1: i32, %arg2: i32, %arg3: memref<16x128xbf16, #tpu.memory_space<vmem>>, %arg4: memref<128x128xbf16, #tpu.memory_space<vmem>>, %arg5: memref<1x128xf32, #tpu.memory_space<vmem>>, %arg6: memref<16x128xf32, #tpu.memory_space<vmem>>) attributes {dimension_semantics = [#tpu.dimension_semantics<parallel>, #tpu.dimension_semantics<parallel>, #tpu.dimension_semantics<arbitrary>], iteration_bounds = array<i64: 1, 1, 1>, scalar_prefetch = 0 : i64, scratch_operands = 0 : i64, tpu.core_type = #tpu.core_type<tc>, window_params = [{transform_indices = @transform_0, window_bounds = array<i64: 16, 128>}, {transform_indices = @transform_1, window_bounds = array<i64: 128, 128>}, {transform_indices = @transform_2, window_bounds = array<i64: 1, 128>}, {transform_indices = @transform_3, window_bounds = array<i64: 16, 128>}]} {
    %c0_i32 = arith.constant 0 : i32
    %0 = arith.cmpi eq, %arg2, %c0_i32 : i32
    %1 = arith.extui %0 : i1 to i32
    %c0_i32_0 = arith.constant 0 : i32
    %2 = arith.cmpi ne, %1, %c0_i32_0 : i32
    scf.if %2 {
      %c0_10 = arith.constant 0 : index
      %c0_11 = arith.constant 0 : index
      %12 = vector.load %arg5[%c0_10, %c0_11] : memref<1x128xf32, #tpu.memory_space<vmem>>, vector<1x128xf32>
      %13 = vector.shape_cast %12 : vector<1x128xf32> to vector<1x128xf32>
      %14 = vector.broadcast %13 : vector<1x128xf32> to vector<16x128xf32>
      %c0_12 = arith.constant 0 : index
      %c0_13 = arith.constant 0 : index
      %15 = vector.load %arg6[%c0_12, %c0_13] : memref<16x128xf32, #tpu.memory_space<vmem>>, vector<16x128xf32>
      tpu.vector_store %arg6[%c0_12, %c0_13], %14 {strides = array<i32>} : memref<16x128xf32, #tpu.memory_space<vmem>>, vector<16x128xf32>,
    } else {
    }
    %c0 = arith.constant 0 : index
    %c0_1 = arith.constant 0 : index
    %3 = vector.load %arg6[%c0, %c0_1] : memref<16x128xf32, #tpu.memory_space<vmem>>, vector<16x128xf32>
    %c0_2 = arith.constant 0 : index
    %c0_3 = arith.constant 0 : index
    %4 = vector.load %arg3[%c0_2, %c0_3] : memref<16x128xbf16, #tpu.memory_space<vmem>>, vector<16x128xbf16>
    %c0_4 = arith.constant 0 : index
    %c0_5 = arith.constant 0 : index
    %5 = vector.load %arg4[%c0_4, %c0_5] : memref<128x128xbf16, #tpu.memory_space<vmem>>, vector<128x128xbf16>
    %cst = arith.constant dense<0.000000e+00> : vector<16x128xf32>
    %6 = tpu.matmul %4, %5, %cst {dimension_numbers = #tpu.dot_dimension_numbers<[1], [0], [0], [1], [0, 0, 1, 1], [], []>} : vector<16x128xbf16>, vector<128x128xbf16>, vector<16x128xf32> -> vector<16x128xf32>
    %7 = arith.addf %3, %6 : vector<16x128xf32>
    %c0_6 = arith.constant 0 : index
    %c0_7 = arith.constant 0 : index
    %8 = vector.load %arg6[%c0_6, %c0_7] : memref<16x128xf32, #tpu.memory_space<vmem>>, vector<16x128xf32>
    tpu.vector_store %arg6[%c0_6, %c0_7], %7 {strides = array<i32>} : memref<16x128xf32, #tpu.memory_space<vmem>>, vector<16x128xf32>,
    %c0_i32_8 = arith.constant 0 : i32
    %9 = arith.cmpi eq, %arg2, %c0_i32_8 : i32
    %10 = arith.extui %9 : i1 to i32
    %c0_i32_9 = arith.constant 0 : i32
    %11 = arith.cmpi ne, %10, %c0_i32_9 : i32
    scf.if %11 {
      %c0_10 = arith.constant 0 : index
      %c0_11 = arith.constant 0 : index
      %12 = vector.load %arg6[%c0_10, %c0_11] : memref<16x128xf32, #tpu.memory_space<vmem>>, vector<16x128xf32>
      %13 = math.tanh %12 : vector<16x128xf32>
      %c0_12 = arith.constant 0 : index
      %c0_13 = arith.constant 0 : index
      %14 = vector.load %arg6[%c0_12, %c0_13] : memref<16x128xf32, #tpu.memory_space<vmem>>, vector<16x128xf32>
      tpu.vector_store %arg6[%c0_12, %c0_13], %13 {strides = array<i32>} : memref<16x128xf32, #tpu.memory_space<vmem>>, vector<16x128xf32>,
    } else {
    }
    return
  }
  func.func @transform_0(%arg0: i32, %arg1: i32, %arg2: i32) -> (i32, i32) {
    %c0_i32 = arith.constant 0 : i32
    return %arg0, %arg2 : i32, i32
  }
  func.func @transform_1(%arg0: i32, %arg1: i32, %arg2: i32) -> (i32, i32) {
    %c0_i32 = arith.constant 0 : i32
    return %arg2, %arg1 : i32, i32
  }
  func.func @transform_2(%arg0: i32, %arg1: i32, %arg2: i32) -> (i32, i32) {
    %c0_i32 = arith.constant 0 : i32
    %c0_i32_0 = arith.constant 0 : i32
    return %c0_i32, %arg1 : i32, i32
  }
  func.func @transform_3(%arg0: i32, %arg1: i32, %arg2: i32) -> (i32, i32) {
    %c0_i32 = arith.constant 0 : i32
    return %arg0, %arg1 : i32, i32
  }
}

</mosaic_0001>

<llo_original>
// kernel: tpu_custom_call.1
$region0: #{tpu_custom_call.1}
  #allocation0 [shape = 'u32[]', space=smem, size = 0x4, offset = 0x4, fixed_abs, tag = 'smem constant byte address 0x4 - core index']
  #allocation1 [shape = 'u32[72,128]{1,0:T(1,128)}', space=vmem, size = 0x9000, scoped, tag = 'internal scratch']
  %s0 = inlined_call_operand.hbm [shape: bf16[16,128], index: 0, kind: input, shape index: {}]
  %s1 = inlined_call_operand.hbm [shape: bf16[128,128], index: 1, kind: input, shape index: {}]
  %s2 = inlined_call_operand.vmem [shape: f32[1,128], index: 2, kind: input, shape index: {}]
  %s3 = inlined_call_operand.hbm [shape: f32[16,128], index: 3, kind: output, shape index: {}]
  %s4 = sld [smem:[#allocation0]]
  $region38: #{tpu_custom_call.1} parent=0
    _
  %s6 = ssub.s32 1, %s4
  %s7 = scalar_select 0, %s6, %s4
  $region1: #{tpu_custom_call.1} parent=0
    #allocation2 [shape = 'u8[4096]{0}', space=vmem, size = 0x1000, scoped, tag = 'input window, operand 0, single buffered']
    #allocation3 [shape = 's32[1]{0}', space=sflag, size = 0x4, scoped, tag = 'scoped memory for tpu_custom_call.1']
    #allocation4 [shape = 's32[1]{0}', space=sflag, size = 0x4, scoped, tag = 'scoped memory for tpu_custom_call.1']
    #allocation5 [shape = 'u8[32768]{0}', space=vmem, size = 0x8000, scoped, tag = 'input window, operand 1, single buffered']
    #allocation6 [shape = 's32[1]{0}', space=sflag, size = 0x4, scoped, tag = 'scoped memory for tpu_custom_call.1']
    #allocation7 [shape = 'u8[8192]{0}', space=vmem, size = 0x2000, scoped, tag = 'output window, operand 0, single buffered']
    %8 = vsyncpa [#allocation3], 0
    %9 = vsyncpa [#allocation6], 0
    %10 = vsyncpa [#allocation4], 0
    // Predicated region
    $region2: #{tpu_custom_call.1} parent=1 // pred_check
      _
    $region3: #{tpu_custom_call.1} parent=1 // pred_check_branch
      %12 = sbr.rel (0) target = $region5
    $region4: #{tpu_custom_call.1} parent=1 // pred_region
      %14 = vsyncadd [#allocation3], 0
      %s15 = sshll.u32 %s0, 4
      %s16 = int_to_ptr.hbm [resolvable:$true] %s15
      %s17 = sshll.u32 [#allocation2], 4
      %s18 = int_to_ptr.vmem [resolvable:$true] %s17
      %23 = dma.hbm_to_vmem [thread:$0]  %s16, 128, %s18, [#allocation3], 64, 64, 4
    $region5: #{tpu_custom_call.1} parent=1 // pred_fallthru
      _
    // Predicated region
    $region6: #{tpu_custom_call.1} parent=1 // pred_check
      _
    $region7: #{tpu_custom_call.1} parent=1 // pred_check_branch
      %25 = sbr.rel (0) target = $region9
    $region8: #{tpu_custom_call.1} parent=1 // pred_region
      %27 = vsyncadd [#allocation6], 0
      %s28 = sshll.u32 %s1, 4
      %s29 = int_to_ptr.hbm [resolvable:$true] %s28
      %s30 = sshll.u32 [#allocation5], 4
      %s31 = int_to_ptr.vmem [resolvable:$true] %s30
      %36 = dma.hbm_to_vmem [thread:$0]  %s29, 1024, %s31, [#allocation6], 64, 64, 4
    $region9: #{tpu_custom_call.1} parent=1 // pred_fallthru
      _
    // Predicated region
    $region10: #{tpu_custom_call.1} parent=1 // pred_check
      _
    $region11: #{tpu_custom_call.1} parent=1 // pred_check_branch
      %38 = sbr.rel (0) target = $region13
    $region12: #{tpu_custom_call.1} parent=1 // pred_region
      _
    $region13: #{tpu_custom_call.1} parent=1 // pred_fallthru
      _
    // Predicated region
    $region14: #{tpu_custom_call.1} parent=1 // pred_check
      _
    $region15: #{tpu_custom_call.1} parent=1 // pred_check_branch
      %40 = sbr.rel (0) target = $region17
    $region16: #{tpu_custom_call.1} parent=1 // pred_region
      %42 = dma.done [#allocation3], 128
    $region17: #{tpu_custom_call.1} parent=1 // pred_fallthru
      _
    // Predicated region
    $region18: #{tpu_custom_call.1} parent=1 // pred_check
      _
    $region19: #{tpu_custom_call.1} parent=1 // pred_check_branch
      %44 = sbr.rel (0) target = $region21
    $region20: #{tpu_custom_call.1} parent=1 // pred_region
      %46 = dma.done [#allocation6], 1024
    $region21: #{tpu_custom_call.1} parent=1 // pred_fallthru
      _
    %p47 = scmp.eq.s32.totalorder 0, 0
    // Predicated region
    $region22: #{tpu_custom_call.1} parent=1 // pred_check
      %p48 = pneg %p47
    $region23: #{tpu_custom_call.1} parent=1 // pred_check_branch
      %50 = sbr.rel (%p48) target = $region25
    $region24: #{tpu_custom_call.1} parent=1 // pred_region
      %v51 = vld [vmem:[%s2] sm:$0x1]
      %v53 = vperm.slane %v51, 0
      %55 = vst [vmem:[#allocation7] sm:$0xff] %v53
      %56 = vst [vmem:[#allocation7 + $0x8] sm:$0xff] %v53
    $region25: #{tpu_custom_call.1} parent=1 // pred_fallthru
      _
    %v57 = vld [vmem:[#allocation7] sm:$0xff]
    %v58 = vld [vmem:[#allocation7 + $0x8] sm:$0xff]
    %v59 = vld [vmem:[#allocation2] sm:$0xf]
    %v60 = vld [vmem:[#allocation2 + $0x4] sm:$0xf]
    %v61 = vld [vmem:[#allocation5] sm:$0xf]
    %v62 = vld [vmem:[#allocation5 + $0x4] sm:$0xf]
    %v63 = vld [vmem:[#allocation5 + $0x8] sm:$0xf]
    %v64 = vld [vmem:[#allocation5 + $0xc] sm:$0xf]
    %v65 = vld [vmem:[#allocation5 + $0x10] sm:$0xf]
    %v66 = vld [vmem:[#allocation5 + $0x14] sm:$0xf]
    %v67 = vld [vmem:[#allocation5 + $0x18] sm:$0xf]
    %v68 = vld [vmem:[#allocation5 + $0x1c] sm:$0xf]
    %v69 = vld [vmem:[#allocation5 + $0x20] sm:$0xf]
    %v70 = vld [vmem:[#allocation5 + $0x24] sm:$0xf]
    %v71 = vld [vmem:[#allocation5 + $0x28] sm:$0xf]
    %v72 = vld [vmem:[#allocation5 + $0x2c] sm:$0xf]
    %v73 = vld [vmem:[#allocation5 + $0x30] sm:$0xf]
    %v74 = vld [vmem:[#allocation5 + $0x34] sm:$0xf]
    %v75 = vld [vmem:[#allocation5 + $0x38] sm:$0xf]
    %v76 = vld [vmem:[#allocation5 + $0x3c] sm:$0xf]
    %v79 = vunpack.c.l.b16 %v59
    %v80 = vunpack.c.l.b16 %v60
    %v81 = vpack.c.b16 %v80, %v79
    %v99 = vunpack.c.l.b16 %v61
    %v100 = vunpack.c.l.b16 %v62
    %v101 = vunpack.c.l.b16 %v63
    %v102 = vunpack.c.l.b16 %v64
    %v103 = vunpack.c.l.b16 %v65
    %v104 = vunpack.c.l.b16 %v66
    %v105 = vunpack.c.l.b16 %v67
    %v106 = vunpack.c.l.b16 %v68
    %v107 = vunpack.c.l.b16 %v69
    %v108 = vunpack.c.l.b16 %v70
    %v109 = vunpack.c.l.b16 %v71
    %v110 = vunpack.c.l.b16 %v72
    %v111 = vunpack.c.l.b16 %v73
    %v112 = vunpack.c.l.b16 %v74
    %v113 = vunpack.c.l.b16 %v75
    %v114 = vunpack.c.l.b16 %v76
    %v115 = vpack.c.b16 %v100, %v99
    %v116 = vpack.c.b16 %v102, %v101
    %v117 = vpack.c.b16 %v104, %v103
    %v118 = vpack.c.b16 %v106, %v105
    %v119 = vpack.c.b16 %v108, %v107
    %v120 = vpack.c.b16 %v110, %v109
    %v121 = vpack.c.b16 %v112, %v111
    %v122 = vpack.c.b16 %v114, %v113
    %131 = vmatpush.bf16.msra.mxu0 %v122
    %132 = vmatpush.bf16.msra.mxu0 %v121
    %133 = vmatpush.bf16.msra.mxu0 %v120
    %134 = vmatpush.bf16.msra.mxu0 %v119
    %135 = vmatpush.bf16.msra.mxu0 %v118
    %136 = vmatpush.bf16.msra.mxu0 %v117
    %137 = vmatpush.bf16.msra.mxu0 %v116
    %138 = vmatpush.bf16.msra.mxu0 %v115
    %139 = vmatmul.bf16.gmra.mxu0 %v81
    %v140 = vpop.f32.mrf.mxu0
    %v141 = vadd.f32 0.0, %v140
    %v142 = vpop.f32.mrf.mxu0
    %v143 = vadd.f32 0.0, %v142
    %144 = vdwg.mxu0
    %v145 = vadd.f32 %v57, %v141
    %v146 = vadd.f32 %v58, %v143
    %147 = vst [vmem:[#allocation7] sm:$0xff] %v145
    %148 = vst [vmem:[#allocation7 + $0x8] sm:$0xff] %v146
    // Predicated region
    $region26: #{tpu_custom_call.1} parent=1 // pred_check
      %p149 = pneg %p47
    $region27: #{tpu_custom_call.1} parent=1 // pred_check_branch
      %151 = sbr.rel (%p149) target = $region29
    $region28: #{tpu_custom_call.1} parent=1 // pred_region
      %v152 = vld [vmem:[#allocation7] sm:$0xff]
      %v153 = vld [vmem:[#allocation7 + $0x8] sm:$0xff]
      %v154 = vtanh.pop %v152
      %v155 = vtanh.pop %v153
      %156 = vst [vmem:[#allocation7] sm:$0xff] %v154
      %157 = vst [vmem:[#allocation7 + $0x8] sm:$0xff] %v155
    $region29: #{tpu_custom_call.1} parent=1 // pred_fallthru
      _
    // Predicated region
    $region30: #{tpu_custom_call.1} parent=1 // pred_check
      _
    $region31: #{tpu_custom_call.1} parent=1 // pred_check_branch
      %159 = sbr.rel (0) target = $region33
    $region32: #{tpu_custom_call.1} parent=1 // pred_region
      %161 = vsyncadd [#allocation4], 0
      %s162 = sshll.u32 [#allocation7], 4
      %s163 = int_to_ptr.vmem [resolvable:$true] %s162
      %s164 = sshll.u32 %s3, 4
      %s165 = int_to_ptr.hbm [resolvable:$true] %s164
      %170 = dma.vmem_to_hbm [thread:$0]  %s163, 256, %s165, [#allocation4], 128, 128, 8
    $region33: #{tpu_custom_call.1} parent=1 // pred_fallthru
      _
    // Predicated region
    $region34: #{tpu_custom_call.1} parent=1 // pred_check
      _
    $region35: #{tpu_custom_call.1} parent=1 // pred_check_branch
      %172 = sbr.rel (0) target = $region37
    $region36: #{tpu_custom_call.1} parent=1 // pred_region
      %174 = dma.done [#allocation4], 256
    $region37: #{tpu_custom_call.1} parent=1 // pred_fallthru
      _
    %175 = vsyncpa [#allocation3], 1
    %176 = vsyncpa [#allocation6], 1
    %177 = vsyncpa [#allocation4], 1

</llo_original>
